<compile_context>
chip_gen: v7x
topology: tpu7x:2x2x1
jax: 0.10.0
libtpu: 0.0.40
codegen_flags: <defaults>
</compile_context>

<pallas_src>
import functools

import jax
import jax.numpy as jnp
from jax import lax
from jax.experimental import pallas as pl
from jax.experimental.pallas import tpu as pltpu

VMEM_SPEC = pl.BlockSpec(memory_space=pltpu.MemorySpace.VMEM)


def _const_spec(shape):
    """Whole-array block, same block for every grid step (stays resident)."""
    nd = len(shape)
    return pl.BlockSpec(shape, lambda t, _nd=nd: (0,) * _nd)


# --------------------------- encoder (1 call, all T) -----------------------

def _encoder_kernel(xattr_ref, wenc_ref, benc_ref, eidx_ref, emb_ref,
                    xenc_ref, eenc_ref):
    f32 = jnp.float32
    x = jnp.dot(xattr_ref[...], wenc_ref[...], preferred_element_type=f32)
    xenc_ref[...] = jnp.maximum(x + benc_ref[...], 0.0)
    te = eidx_ref.shape[0]
    v = emb_ref.shape[0]
    onehot = (eidx_ref[...] ==
              lax.broadcasted_iota(jnp.int32, (te, v), 1)).astype(f32)
    eenc_ref[...] = jnp.dot(onehot, emb_ref[...], preferred_element_type=f32)


def encode(x_attr_stack, w_enc, b_enc, e_idx_stack, emb):
    tn = x_attr_stack.shape[0]
    te = e_idx_stack.shape[0]
    nh = w_enc.shape[1]
    eh = emb.shape[1]
    return pl.pallas_call(
        _encoder_kernel,
        out_shape=(jax.ShapeDtypeStruct((tn, nh), jnp.float32),
                   jax.ShapeDtypeStruct((te, eh), jnp.float32)),
        in_specs=[VMEM_SPEC] * 5,
        out_specs=(VMEM_SPEC, VMEM_SPEC),
    )(x_attr_stack, w_enc, b_enc.reshape(1, -1),
      e_idx_stack.reshape(te, 1).astype(jnp.int32), emb)


# --------------------- fused GN processing steps (1 call) ------------------

def _gn_step_kernel(snd_ref, rcv_ref, sp_l_ref, g0_ref, x_ref, e_ref,
                    we_he, we_hxs, we_hxr, we_et, we_xts, we_xtr, we_g, be,
                    wn_hx, wn_xt, wn_rcv, wn_snd, wn_g, bn,
                    wg_x, wg_e, wg_g, bg,
                    xs_out, td_out, sd_out,
                    s_sc, r_sc, hx_sc, he_sc, g_sc,
                    *, coeff, skip):
    f32 = jnp.float32
    t = pl.program_id(0)
    e_dim, n_dim = s_sc.shape

    @pl.when(t == 0)
    def _init():
        node_iota = lax.broadcasted_iota(jnp.int32, (e_dim, n_dim), 1)
        s_sc[...] = (snd_ref[...] == node_iota).astype(f32)
        r_sc[...] = (rcv_ref[...] == node_iota).astype(f32)
        hx_sc[...] = jnp.zeros_like(hx_sc)
        he_sc[...] = jnp.zeros_like(he_sc)
        g_sc[...] = g0_ref[...]

    S = s_sc[...]
    R = r_sc[...]
    h_x = hx_sc[...]
    h_e = he_sc[...]
    g = g_sc[...]
    x_t = x_ref[...]
    e_t = e_ref[...]

    # --- edge block: gathers via one-hot matmuls, weight-split accumulation
    gs_hx = jnp.dot(S, h_x, preferred_element_type=f32)   # h_x[senders]
    gr_hx = jnp.dot(R, h_x, preferred_element_type=f32)   # h_x[receivers]
    gs_xt = jnp.dot(S, x_t, preferred_element_type=f32)   # x_t[senders]
    gr_xt = jnp.dot(R, x_t, preferred_element_type=f32)   # x_t[receivers]

    pre_e = (jnp.dot(h_e, we_he[...], preferred_element_type=f32)
             + jnp.dot(gs_hx, we_hxs[...], preferred_element_type=f32)
             + jnp.dot(gr_hx, we_hxr[...], preferred_element_type=f32)
             + jnp.dot(e_t, we_et[...], preferred_element_type=f32)
             + jnp.dot(gs_xt, we_xts[...], preferred_element_type=f32)
             + jnp.dot(gr_xt, we_xtr[...], preferred_element_type=f32)
             + jnp.dot(g, we_g[...], preferred_element_type=f32)   # global as bias row
             + be[...])
    new_e = jnp.maximum(pre_e, 0.0)

    # --- node block: scatter-add via one-hot^T matmuls
    agg_r = lax.dot_general(R, new_e, (((0,), (0,)), ((), ())),
                            preferred_element_type=f32)            # (N, Eh)
    agg_s = lax.dot_general(S, new_e, (((0,), (0,)), ((), ())),
                            preferred_element_type=f32)            # (N, Eh)

    pre_x = (jnp.dot(h_x, wn_hx[...], preferred_element_type=f32)
             + jnp.dot(x_t, wn_xt[...], preferred_element_type=f32)
             + jnp.dot(agg_r, wn_rcv[...], preferred_element_type=f32)
             + jnp.dot(agg_s, wn_snd[...], preferred_element_type=f32)
             + jnp.dot(g, wn_g[...], preferred_element_type=f32)
             + bn[...])
    new_x = jnp.maximum(pre_x, 0.0)
    if skip:
        new_x = new_x + h_x

    # --- global block (scatter_mean over a single graph == mean over rows)
    mean_x = jnp.mean(new_x, axis=0, keepdims=True)
    mean_e = jnp.mean(new_e, axis=0, keepdims=True)
    new_g = jnp.maximum(
        jnp.dot(mean_x, wg_x[...], preferred_element_type=f32)
        + jnp.dot(mean_e, wg_e[...], preferred_element_type=f32)
        + jnp.dot(g, wg_g[...], preferred_element_type=f32)
        + bg[...], 0.0)

    # --- outputs (fused derivatives)
    # TODO(synk): exact derivative definitions live inside the missing
    # PhysicsInformedGNConv; using dt = x_new - x_prev and (pde='diff')
    # dx = coeff * (sp_L @ x_new).
    xs_out[...] = new_x
    td_out[...] = new_x - h_x
    sd_out[...] = coeff * jnp.dot(sp_l_ref[...], new_x,
                                  preferred_element_type=f32)

    # --- carry state to next grid step
    hx_sc[...] = new_x
    he_sc[...] = new_e
    g_sc[...] = new_g


def gn_steps(senders, receivers, sp_L, g0, x_stack, e_stack, kw,
             *, coeff, skip):
    T, N, Nh = x_stack.shape
    _, E, Eh = e_stack.shape
    Gh = g0.shape[1]

    weight_args = (kw["we_he"], kw["we_hxs"], kw["we_hxr"], kw["we_et"],
                   kw["we_xts"], kw["we_xtr"], kw["we_g"], kw["be"],
                   kw["wn_hx"], kw["wn_xt"], kw["wn_rcv"], kw["wn_snd"],
                   kw["wn_g"], kw["bn"],
                   kw["wg_x"], kw["wg_e"], kw["wg_g"], kw["bg"])

    in_specs = ([_const_spec(senders.shape), _const_spec(receivers.shape),
                 _const_spec(sp_L.shape), _const_spec(g0.shape),
                 pl.BlockSpec((None, N, Nh), lambda t: (t, 0, 0)),
                 pl.BlockSpec((None, E, Eh), lambda t: (t, 0, 0))]
                + [_const_spec(w.shape) for w in weight_args])

    out_specs = [pl.BlockSpec((None, N, Nh), lambda t: (t, 0, 0))
                 for _ in range(3)]
    out_shape = [jax.ShapeDtypeStruct((T, N, Nh), jnp.float32)
                 for _ in range(3)]

    scratch_shapes = [
        pltpu.VMEM((E, N), jnp.float32),   # S = onehot(senders)
        pltpu.VMEM((E, N), jnp.float32),   # R = onehot(receivers)
        pltpu.VMEM((N, Nh), jnp.float32),  # carried h_x
        pltpu.VMEM((E, Eh), jnp.float32),  # carried h_e
        pltpu.VMEM((1, Gh), jnp.float32),  # carried g
    ]

    return pl.pallas_call(
        functools.partial(_gn_step_kernel, coeff=float(coeff), skip=bool(skip)),
        grid=(T,),
        in_specs=in_specs,
        out_specs=out_specs,
        out_shape=out_shape,
        scratch_shapes=scratch_shapes,
        compiler_params=pltpu.CompilerParams(
            dimension_semantics=("arbitrary",)),   # state carried across steps
    )(senders, receivers, sp_L, g0, x_stack, e_stack, *weight_args)


# --------------------------- decoder (1 call, all T) -----------------------

def _decoder_kernel(x_ref, w1, b1, w2, b2, w3, b3, w4, b4, out_ref, pred_ref):
    f32 = jnp.float32
    x = x_ref[...]
    h1 = jnp.maximum(jnp.dot(x, w1[...], preferred_element_type=f32) + b1[...], 0.0)
    out_ref[...] = jnp.dot(h1, w2[...], preferred_element_type=f32) + b2[...]
    h2 = jnp.maximum(jnp.dot(x, w3[...], preferred_element_type=f32) + b3[...], 0.0)
    pred_ref[...] = jnp.dot(h2, w4[...], preferred_element_type=f32) + b4[...]


def decode(x_stack, w1, b1, w2, b2, w3, b3, w4, b4):
    tn = x_stack.shape[0]
    out = w2.shape[1]
    attr = w4.shape[1]
    return pl.pallas_call(
        _decoder_kernel,
        out_shape=(jax.ShapeDtypeStruct((tn, out), jnp.float32),
                   jax.ShapeDtypeStruct((tn, attr), jnp.float32)),
        in_specs=[VMEM_SPEC] * 9,
        out_specs=(VMEM_SPEC, VMEM_SPEC),
    )(x_stack, w1, b1.reshape(1, -1), w2, b2.reshape(1, -1),
      w3, b3.reshape(1, -1), w4, b4.reshape(1, -1))


# ----------------------------- parameters ---------------------------------

def init_params(key, node_attr_size, edge_num_embeddings, out_size,
                edge_h, node_h, global_h):
    keys = jax.random.split(key, 10)

    def lin(k, din, dout):
        w = jax.random.normal(k, (din, dout), jnp.float32) / jnp.sqrt(float(din))
        b = jnp.zeros((dout,), jnp.float32)
        return (w, b)

    eb_in = (edge_h + node_h * 2) * 2 + global_h
    nb_in = node_h * 2 + edge_h * 2 + global_h
    gb_in = node_h + edge_h + global_h
    return {
        "edge_emb": 0.1 * jax.random.normal(
            keys[0], (edge_num_embeddings, edge_h), jnp.float32),
        "node_enc": lin(keys[1], node_attr_size, node_h),
        "eb": lin(keys[2], eb_in, edge_h),
        "nb": lin(keys[3], nb_in, node_h),
        "gb": lin(keys[4], gb_in, global_h),
        "dec1": lin(keys[5], node_h, node_h),
        "dec2": lin(keys[6], node_h, out_size),
        "dec_in1": lin(keys[7], node_h, node_h),
        "dec_in2": lin(keys[8], node_h, node_attr_size),
    }


def _split_block_weights(params, Eh, Nh, Gh):
    """Split the concatenated-input Linear weights row-wise, once.

    Equivalent to Linear(concat([...])) but lets the fused kernel accumulate
    partial matmuls instead of materializing the concatenated inputs.
    eb_in layout: [h_e | hx_s | hx_r | e_t | xt_s | xt_r | g]
    nb_in layout: [h_x | x_t | recv_agg | sent_agg | g]
    gb_in layout: [mean_x | mean_e | g]
    """
    ew, eb = params["eb"]
    nw, nb = params["nb"]
    gw, gb = params["gb"]
    o1, o2, o3 = Eh, Eh + Nh, Eh + 2 * Nh
    o4, o5, o6 = 2 * Eh + 2 * Nh, 2 * Eh + 3 * Nh, 2 * Eh + 4 * Nh
    return dict(
        we_he=ew[0:o1], we_hxs=ew[o1:o2], we_hxr=ew[o2:o3],
        we_et=ew[o3:o4], we_xts=ew[o4:o5], we_xtr=ew[o5:o6],
        we_g=ew[o6:o6 + Gh], be=eb.reshape(1, -1),
        wn_hx=nw[0:Nh], wn_xt=nw[Nh:2 * Nh],
        wn_rcv=nw[2 * Nh:2 * Nh + Eh], wn_snd=nw[2 * Nh + Eh:2 * Nh + 2 * Eh],
        wn_g=nw[2 * Nh + 2 * Eh:2 * Nh + 2 * Eh + Gh], bn=nb.reshape(1, -1),
        wg_x=gw[0:Nh], wg_e=gw[Nh:Nh + Eh], wg_g=gw[Nh + Eh:Nh + Eh + Gh],
        bg=gb.reshape(1, -1),
    )


# ------------------------------ forward -----------------------------------

def net_forward(params, node_attrs, edge_index, edge_attrs, global_attr,
                sp_L, num_processing_steps, coeff, pde="diff", skip=False):
    T = num_processing_steps
    senders = edge_index[0].reshape(-1, 1).astype(jnp.int32)
    receivers = edge_index[1].reshape(-1, 1).astype(jnp.int32)
    N = node_attrs[0].shape[0]
    E = senders.shape[0]

    emb = params["edge_emb"]
    Eh = emb.shape[1]
    w_enc, b_enc = params["node_enc"]
    Nh = w_enc.shape[1]
    Gh = params["gb"][0].shape[1]

    # --- batched per-step input encoding (one pallas_call for all T steps)
    x_attr_stack = jnp.concatenate(list(node_attrs), axis=0)            # (T*N, attr)
    e_idx_stack = jnp.concatenate([a.reshape(-1) for a in edge_attrs])  # (T*E,)
    x_enc, e_enc = encode(x_attr_stack, w_enc, b_enc, e_idx_stack, emb)
    x_stack = x_enc.reshape(T, N, Nh)
    e_stack = e_enc.reshape(T, E, Eh)

    # --- one-time weight split (replaces per-step concatenations)
    kw = _split_block_weights(params, Eh, Nh, Gh)

    # --- all T message-passing steps in ONE fused pallas_call (grid over T)
    # TODO(synk): PhysicsInformedGNConv / *Block sources were not provided;
    # wiring below is reconstructed from the declared Linear input sizes.
    xs, td, sd = gn_steps(senders, receivers, sp_L, global_attr,
                          x_stack, e_stack, kw, coeff=coeff, skip=skip)

    # --- batched decoders (one pallas_call for all T steps, both heads)
    out_flat, pred_flat = decode(xs.reshape(T * N, Nh),
                                 *params["dec1"], *params["dec2"],
                                 *params["dec_in1"], *params["dec_in2"])

    output_nodes = [out_flat[t * N:(t + 1) * N] for t in range(T)]
    pred_inputs = [pred_flat[t * N:(t + 1) * N] for t in range(T)]
    time_derivs = [td[t] for t in range(T)]
    spatial_derivs = [sd[t] for t in range(T)]
    return output_nodes, time_derivs, spatial_derivs, pred_inputs


# ------------------------------- demo --------------------------------------

if __name__ == "__main__":
    # Small, module-consistent sizes.
    N_NODES = 16
    N_EDGES = 32
    NODE_ATTR_SIZE = 8
    EDGE_NUM_EMBEDDINGS = 16
    OUT_SIZE = 4
    EDGE_H = NODE_H = GLOBAL_H = 32
    NUM_STEPS = 3
    COEFF = 0.1

    key = jax.random.PRNGKey(0)
    k_param, k_graph = jax.random.split(key)
    params = init_params(k_param, NODE_ATTR_SIZE, EDGE_NUM_EMBEDDINGS,
                         OUT_SIZE, EDGE_H, NODE_H, GLOBAL_H)

    ks = jax.random.split(k_graph, 4 + 2 * NUM_STEPS)
    edge_index = jnp.stack([
        jax.random.randint(ks[0], (N_EDGES,), 0, N_NODES, dtype=jnp.int32),
        jax.random.randint(ks[1], (N_EDGES,), 0, N_NODES, dtype=jnp.int32),
    ], axis=0)
    global_attr = jax.random.normal(ks[2], (1, GLOBAL_H), jnp.float32)

    node_attrs = [jax.random.normal(ks[4 + 2 * t],
                                    (N_NODES, NODE_ATTR_SIZE), jnp.float32)
                  for t in range(NUM_STEPS)]
    edge_attrs = [jax.random.randint(ks[5 + 2 * t], (N_EDGES,),
                                     0, EDGE_NUM_EMBEDDINGS, dtype=jnp.int32)
                  for t in range(NUM_STEPS)]

    # Dense graph Laplacian for the spatial (diffusion) operator.
    adj = jnp.zeros((N_NODES, N_NODES), jnp.float32)
    adj = adj.at[edge_index[0], edge_index[1]].add(1.0)
    sp_L = jnp.diag(jnp.sum(adj, axis=1)) - adj

    outs = net_forward(params, node_attrs, edge_index, edge_attrs, global_attr,
                       sp_L, NUM_STEPS, COEFF, pde="diff", skip=False)
    jax.block_until_ready(outs)

    output_nodes, time_derivs, spatial_derivs, pred_inputs = outs
    assert len(output_nodes) == NUM_STEPS
    assert output_nodes[0].shape == (N_NODES, OUT_SIZE)
    assert time_derivs[0].shape == (N_NODES, NODE_H)
    assert spatial_derivs[0].shape == (N_NODES, NODE_H)
    assert pred_inputs[0].shape == (N_NODES, NODE_ATTR_SIZE)
    print("KERNEL_OK")
</pallas_src>

<mosaic_0001>
module attributes {stable_mosaic.version = 11 : i64} {
  func.func @_encoder_kernel(%arg0: memref<48x8xf32, #tpu.memory_space<vmem>>, %arg1: memref<8x32xf32, #tpu.memory_space<vmem>>, %arg2: memref<1x32xf32, #tpu.memory_space<vmem>>, %arg3: memref<96x1xi32, #tpu.memory_space<vmem>>, %arg4: memref<16x32xf32, #tpu.memory_space<vmem>>, %arg5: memref<48x32xf32, #tpu.memory_space<vmem>>, %arg6: memref<96x32xf32, #tpu.memory_space<vmem>>) attributes {dimension_semantics = [], scalar_prefetch = 0 : i64, scratch_operands = 0 : i64, tpu.core_type = #tpu.core_type<tc>} {
    %c0 = arith.constant 0 : index
    %c0_0 = arith.constant 0 : index
    %0 = vector.load %arg0[%c0, %c0_0] : memref<48x8xf32, #tpu.memory_space<vmem>>, vector<48x8xf32>
    %c0_1 = arith.constant 0 : index
    %c0_2 = arith.constant 0 : index
    %1 = vector.load %arg1[%c0_1, %c0_2] : memref<8x32xf32, #tpu.memory_space<vmem>>, vector<8x32xf32>
    %cst = arith.constant dense<0.000000e+00> : vector<48x32xf32>
    %2 = tpu.matmul %0, %1, %cst {dimension_numbers = #tpu.dot_dimension_numbers<[1], [0], [0], [1], [0, 0, 1, 1], [], []>} : vector<48x8xf32>, vector<8x32xf32>, vector<48x32xf32> -> vector<48x32xf32>
    %c0_3 = arith.constant 0 : index
    %c0_4 = arith.constant 0 : index
    %3 = vector.load %arg2[%c0_3, %c0_4] : memref<1x32xf32, #tpu.memory_space<vmem>>, vector<1x32xf32>
    %4 = vector.broadcast %3 : vector<1x32xf32> to vector<48x32xf32>
    %5 = arith.addf %2, %4 : vector<48x32xf32>
    %cst_5 = arith.constant 0.000000e+00 : f32
    %6 = vector.broadcast %cst_5 : f32 to vector<48x32xf32>
    %7 = arith.maximumf %5, %6 : vector<48x32xf32>
    %c0_6 = arith.constant 0 : index
    %c0_7 = arith.constant 0 : index
    %8 = vector.load %arg5[%c0_6, %c0_7] : memref<48x32xf32, #tpu.memory_space<vmem>>, vector<48x32xf32>
    tpu.vector_store %arg5[%c0_6, %c0_7], %7 {strides = array<i32>} : memref<48x32xf32, #tpu.memory_space<vmem>>, vector<48x32xf32>,
    %c0_8 = arith.constant 0 : index
    %c0_9 = arith.constant 0 : index
    %9 = vector.load %arg3[%c0_8, %c0_9] : memref<96x1xi32, #tpu.memory_space<vmem>>, vector<96x1xi32>
    %10 = tpu.iota {dimensions = array<i32: 1>} : vector<96x16xi32>
    %11 = vector.broadcast %9 : vector<96x1xi32> to vector<96x16xi32>
    %12 = arith.cmpi eq, %11, %10 : vector<96x16xi32>
    %13 = arith.extui %12 : vector<96x16xi1> to vector<96x16xi32>
    %14 = arith.sitofp %13 : vector<96x16xi32> to vector<96x16xf32>
    %c0_10 = arith.constant 0 : index
    %c0_11 = arith.constant 0 : index
    %15 = vector.load %arg4[%c0_10, %c0_11] : memref<16x32xf32, #tpu.memory_space<vmem>>, vector<16x32xf32>
    %cst_12 = arith.constant dense<0.000000e+00> : vector<96x32xf32>
    %16 = tpu.matmul %14, %15, %cst_12 {dimension_numbers = #tpu.dot_dimension_numbers<[1], [0], [0], [1], [0, 0, 1, 1], [], []>} : vector<96x16xf32>, vector<16x32xf32>, vector<96x32xf32> -> vector<96x32xf32>
    %c0_13 = arith.constant 0 : index
    %c0_14 = arith.constant 0 : index
    %17 = vector.load %arg6[%c0_13, %c0_14] : memref<96x32xf32, #tpu.memory_space<vmem>>, vector<96x32xf32>
    tpu.vector_store %arg6[%c0_13, %c0_14], %16 {strides = array<i32>} : memref<96x32xf32, #tpu.memory_space<vmem>>, vector<96x32xf32>,
    return
  }
}

</mosaic_0001>

<llo_original>
// kernel: tpu_custom_call.1
$region0: #{tpu_custom_call.1}
  #allocation0 [shape = 'u32[]', space=smem, size = 0x4, offset = 0x4, fixed_abs, tag = 'smem constant byte address 0x4 - core index']
  #allocation1 [shape = 'u32[144,128]{1,0:T(1,128)}', space=vmem, size = 0x12000, scoped, tag = 'internal scratch']
  %s0 = inlined_call_operand.vmem [shape: f32[48,8], index: 0, kind: input, shape index: {}]
  %s1 = inlined_call_operand.vmem [shape: f32[8,32], index: 1, kind: input, shape index: {}]
  %s2 = inlined_call_operand.vmem [shape: f32[1,32], index: 2, kind: input, shape index: {}]
  %s3 = inlined_call_operand.vmem [shape: s32[96,1], index: 3, kind: input, shape index: {}]
  %s4 = inlined_call_operand.vmem [shape: f32[16,32], index: 4, kind: input, shape index: {}]
  %s5 = inlined_call_operand.vmem [shape: f32[48,32], index: 5, kind: output, shape index: {0}]
  %s6 = inlined_call_operand.vmem [shape: f32[96,32], index: 6, kind: output, shape index: {1}]
  %7 = xla_tuple %s5, %s6
  %s8 = sld [smem:[#allocation0]]
  $region38: #{tpu_custom_call.1} parent=0
    _
  %s10 = ssub.s32 1, %s8
  %s11 = scalar_select 0, %s10, %s8
  // Predicated region
  $region2: #{tpu_custom_call.1} parent=0 // pred_check
    _
  $region3: #{tpu_custom_call.1} parent=0 // pred_check_branch
    %13 = sbr.rel (0) target = $region5
  $region4: #{tpu_custom_call.1} parent=0 // pred_region
    _
  $region5: #{tpu_custom_call.1} parent=0 // pred_fallthru
    _
  // Predicated region
  $region6: #{tpu_custom_call.1} parent=0 // pred_check
    _
  $region7: #{tpu_custom_call.1} parent=0 // pred_check_branch
    %15 = sbr.rel (0) target = $region9
  $region8: #{tpu_custom_call.1} parent=0 // pred_region
    _
  $region9: #{tpu_custom_call.1} parent=0 // pred_fallthru
    _
  // Predicated region
  $region10: #{tpu_custom_call.1} parent=0 // pred_check
    _
  $region11: #{tpu_custom_call.1} parent=0 // pred_check_branch
    %17 = sbr.rel (0) target = $region13
  $region12: #{tpu_custom_call.1} parent=0 // pred_region
    _
  $region13: #{tpu_custom_call.1} parent=0 // pred_fallthru
    _
  // Predicated region
  $region14: #{tpu_custom_call.1} parent=0 // pred_check
    _
  $region15: #{tpu_custom_call.1} parent=0 // pred_check_branch
    %19 = sbr.rel (0) target = $region17
  $region16: #{tpu_custom_call.1} parent=0 // pred_region
    _
  $region17: #{tpu_custom_call.1} parent=0 // pred_fallthru
    _
  // Predicated region
  $region18: #{tpu_custom_call.1} parent=0 // pred_check
    _
  $region19: #{tpu_custom_call.1} parent=0 // pred_check_branch
    %21 = sbr.rel (0) target = $region21
  $region20: #{tpu_custom_call.1} parent=0 // pred_region
    _
  $region21: #{tpu_custom_call.1} parent=0 // pred_fallthru
    _
  %v22 = vld [vmem:[%s0] sm:$0xff]
  %v23 = vld [vmem:[%s0 + $0x8] sm:$0xff]
  %v24 = vld [vmem:[%s0 + $0x10] sm:$0xff]
  %v25 = vld [vmem:[%s0 + $0x18] sm:$0xff]
  %v26 = vld [vmem:[%s0 + $0x20] sm:$0xff]
  %v27 = vld [vmem:[%s0 + $0x28] sm:$0xff]
  %v28 = vld [vmem:[%s1] sm:$0xff]
  %v29 = vld [vmem:[%s2] sm:$0x1]
  %v31 = vlaneseq
  %v32 = vshrl.u32 %v31, 7
  %v33 = vsub.s32 0, %v32
  %v34 = vrot.slane %v29, %v33
  %vm36 = vcmask 64512
  %v38 = vsel %vm36, %v22, 0
  %v41 = vsel %vm36, %v23, 0
  %v44 = vsel %vm36, %v24, 0
  %v47 = vsel %vm36, %v25, 0
  %v50 = vsel %vm36, %v26, 0
  %v53 = vsel %vm36, %v27, 0
  %55 = vmatprep.subr.mxu0 0.0
  %56 = vmatpush1.msra.mxu0 %v28
  %57 = vmatprep.subr.mxu0 0.0
  %58 = vmatpush1.msra.mxu0 0.0
  %59 = vmatprep.subr.mxu0 0.0
  %60 = vmatpush1.msra.mxu0 0.0
  %61 = vmatprep.subr.mxu0 0.0
  %62 = vmatpush1.msra.mxu0 0.0
  %63 = vmatprep.subr.mxu0 0.0
  %64 = vmatpush1.msra.mxu0 0.0
  %65 = vmatprep.subr.mxu0 0.0
  %66 = vmatpush1.msra.mxu0 0.0
  %67 = vmatprep.subr.mxu0 0.0
  %68 = vmatpush1.msra.mxu0 0.0
  %69 = vmatprep.subr.mxu0 0.0
  %70 = vmatpush1.msra.mxu0 0.0
  %71 = vmatprep.subr.mxu0 0.0
  %72 = vmatpush1.msra.mxu0 0.0
  %73 = vmatprep.subr.mxu0 0.0
  %74 = vmatpush1.msra.mxu0 0.0
  %75 = vmatprep.subr.mxu0 0.0
  %76 = vmatpush1.msra.mxu0 0.0
  %77 = vmatprep.subr.mxu0 0.0
  %78 = vmatpush1.msra.mxu0 0.0
  %79 = vmatprep.subr.mxu0 0.0
  %80 = vmatpush1.msra.mxu0 0.0
  %81 = vmatprep.subr.mxu0 0.0
  %82 = vmatpush1.msra.mxu0 0.0
  %83 = vmatprep.subr.mxu0 0.0
  %84 = vmatpush1.msra.mxu0 0.0
  %85 = vmatprep.subr.mxu0 0.0
  %86 = vmatpush1.msra.mxu0 0.0
  %87 = vmatprep.subr.mxu0 0.0
  %88 = vmatpush1.msra.mxu0 0.0
  %89 = vmatprep.subr.mxu0 0.0
  %90 = vmatpush1.msra.mxu0 0.0
  %91 = vmatprep.subr.mxu0 0.0
  %92 = vmatpush1.msra.mxu0 0.0
  %93 = vmatprep.subr.mxu0 0.0
  %94 = vmatpush1.msra.mxu0 0.0
  %95 = vmatprep.subr.mxu0 0.0
  %96 = vmatpush1.msra.mxu0 0.0
  %97 = vmatprep.subr.mxu0 0.0
  %98 = vmatpush1.msra.mxu0 0.0
  %99 = vmatprep.subr.mxu0 0.0
  %100 = vmatpush1.msra.mxu0 0.0
  %101 = vmatprep.subr.mxu0 0.0
  %102 = vmatpush1.msra.mxu0 0.0
  %103 = vmatprep.subr.mxu0 0.0
  %104 = vmatpush1.msra.mxu0 0.0
  %105 = vmatprep.subr.mxu0 0.0
  %106 = vmatpush1.msra.mxu0 0.0
  %107 = vmatprep.subr.mxu0 0.0
  %108 = vmatpush1.msra.mxu0 0.0
  %109 = vmatprep.subr.mxu0 0.0
  %110 = vmatpush1.msra.mxu0 0.0
  %111 = vmatprep.subr.mxu0 0.0
  %112 = vmatpush1.msra.mxu0 0.0
  %113 = vmatprep.subr.mxu0 0.0
  %114 = vmatpush1.msra.mxu0 0.0
  %115 = vmatprep.subr.mxu0 0.0
  %116 = vmatpush1.msra.mxu0 0.0
  %117 = vmatprep.subr.mxu0 0.0
  %118 = vmatpush1.msra.mxu0 0.0
  %119 = vmatprep.mubr.f32.mxu0 0.0
  %120 = vmatmul.mubr.f32.gmra.mrb[0].mxu0 %v38
  %v121 = vpop.f32.mrb[0].mxu0
  %v122 = vadd.f32 %v34, %v121
  %v123 = vpop.f32.mrb[0].mxu0
  %124 = vmatprep.mubr.f32.mxu0 0.0
  %125 = vmatmul.mubr.f32.gmra.mrb[0].mxu0 %v41
  %v126 = vpop.f32.mrb[0].mxu0
  %v127 = vadd.f32 %v34, %v126
  %v128 = vpop.f32.mrb[0].mxu0
  %129 = vmatprep.mubr.f32.mxu0 0.0
  %130 = vmatmul.mubr.f32.gmra.mrb[0].mxu0 %v44
  %v131 = vpop.f32.mrb[0].mxu0
  %v132 = vadd.f32 %v34, %v131
  %v133 = vpop.f32.mrb[0].mxu0
  %134 = vmatprep.mubr.f32.mxu0 0.0
  %135 = vmatmul.mubr.f32.gmra.mrb[0].mxu0 %v47
  %v136 = vpop.f32.mrb[0].mxu0
  %v137 = vadd.f32 %v34, %v136
  %v138 = vpop.f32.mrb[0].mxu0
  %139 = vmatprep.mubr.f32.mxu0 0.0
  %140 = vmatmul.mubr.f32.gmra.mrb[0].mxu0 %v50
  %v141 = vpop.f32.mrb[0].mxu0
  %v142 = vadd.f32 %v34, %v141
  %v143 = vpop.f32.mrb[0].mxu0
  %144 = vmatprep.mubr.f32.mxu0 0.0
  %145 = vmatmul.mubr.f32.gmra.mrb[0].mxu0 %v53
  %v146 = vpop.f32.mrb[0].mxu0
  %v147 = vadd.f32 %v34, %v146
  %v148 = vpop.f32.mrb[0].mxu0
  %149 = vdwg.mxu0
  %v150 = vmax.f32 %v122, 0.0
  %v151 = vmax.f32 %v127, 0.0
  %v152 = vmax.f32 %v132, 0.0
  %v153 = vmax.f32 %v137, 0.0
  %v154 = vmax.f32 %v142, 0.0
  %v155 = vmax.f32 %v147, 0.0
  %vm156 = vcmask 261120
  %157 = vst.msk [vmem:[%s5] sm:$0xff] %vm156, %v150
  %158 = vst.msk [vmem:[%s5 + $0x8] sm:$0xff] %vm156, %v151
  %159 = vst.msk [vmem:[%s5 + $0x10] sm:$0xff] %vm156, %v152
  %160 = vst.msk [vmem:[%s5 + $0x18] sm:$0xff] %vm156, %v153
  %161 = vst.msk [vmem:[%s5 + $0x20] sm:$0xff] %vm156, %v154
  %162 = vst.msk [vmem:[%s5 + $0x28] sm:$0xff] %vm156, %v155
  %v163 = vld [vmem:[%s3] sm:$0xff]
  %v164 = vld [vmem:[%s3 + $0x8] sm:$0xff]
  %v165 = vld [vmem:[%s3 + $0x10] sm:$0xff]
  %v166 = vld [vmem:[%s3 + $0x18] sm:$0xff]
  %v167 = vld [vmem:[%s3 + $0x20] sm:$0xff]
  %v168 = vld [vmem:[%s3 + $0x28] sm:$0xff]
  %v169 = vld [vmem:[%s3 + $0x30] sm:$0xff]
  %v170 = vld [vmem:[%s3 + $0x38] sm:$0xff]
  %v171 = vld [vmem:[%s3 + $0x40] sm:$0xff]
  %v172 = vld [vmem:[%s3 + $0x48] sm:$0xff]
  %v173 = vld [vmem:[%s3 + $0x50] sm:$0xff]
  %v174 = vld [vmem:[%s3 + $0x58] sm:$0xff]
  %v175 = vlaneseq
  %v176 = vand.u32 %v175, 127
  %177 = vset.pattern.permute.xlu0 0
  %178 = vperm.xlu0 %177, %v163
  %v179 = vpop.permute.xlu0 %178
  %180 = vset.pattern.permute.xlu0 0
  %181 = vperm.xlu0 %180, %v164
  %v182 = vpop.permute.xlu0 %181
  %183 = vset.pattern.permute.xlu0 0
  %184 = vperm.xlu0 %183, %v165
  %v185 = vpop.permute.xlu0 %184
  %186 = vset.pattern.permute.xlu0 0
  %187 = vperm.xlu0 %186, %v166
  %v188 = vpop.permute.xlu0 %187
  %189 = vset.pattern.permute.xlu0 0
  %190 = vperm.xlu0 %189, %v167
  %v191 = vpop.permute.xlu0 %190
  %192 = vset.pattern.permute.xlu0 0
  %193 = vperm.xlu0 %192, %v168
  %v194 = vpop.permute.xlu0 %193
  %195 = vset.pattern.permute.xlu0 0
  %196 = vperm.xlu0 %195, %v169
  %v197 = vpop.permute.xlu0 %196
  %198 = vset.pattern.permute.xlu0 0
  %199 = vperm.xlu0 %198, %v170
  %v200 = vpop.permute.xlu0 %199
  %201 = vset.pattern.permute.xlu0 0
  %202 = vperm.xlu0 %201, %v171
  %v203 = vpop.permute.xlu0 %202
  %204 = vset.pattern.permute.xlu0 0
  %205 = vperm.xlu0 %204, %v172
  %v206 = vpop.permute.xlu0 %205
  %207 = vset.pattern.permute.xlu0 0
  %208 = vperm.xlu0 %207, %v173
  %v209 = vpop.permute.xlu0 %208
  %210 = vset.pattern.permute.xlu0 0
  %211 = vperm.xlu0 %210, %v174
  %v212 = vpop.permute.xlu0 %211
  %vm213 = vcmp.eq.s32.totalorder %v179, %v176
  %vm214 = vcmp.eq.s32.totalorder %v182, %v176
  %vm215 = vcmp.eq.s32.totalorder %v185, %v176
  %vm216 = vcmp.eq.s32.totalorder %v188, %v176
  %vm217 = vcmp.eq.s32.totalorder %v191, %v176
  %vm218 = vcmp.eq.s32.totalorder %v194, %v176
  %vm219 = vcmp.eq.s32.totalorder %v197, %v176
  %vm220 = vcmp.eq.s32.totalorder %v200, %v176
  %vm221 = vcmp.eq.s32.totalorder %v203, %v176
  %vm222 = vcmp.eq.s32.totalorder %v206, %v176
  %vm223 = vcmp.eq.s32.totalorder %v209, %v176
  %vm224 = vcmp.eq.s32.totalorder %v212, %v176
  %v225 = vsel %vm213, 1, 0
  %v226 = vsel %vm214, 1, 0
  %v227 = vsel %vm215, 1, 0
  %v228 = vsel %vm216, 1, 0
  %v229 = vsel %vm217, 1, 0
  %v230 = vsel %vm218, 1, 0
  %v231 = vsel %vm219, 1, 0
  %v232 = vsel %vm220, 1, 0
  %v233 = vsel %vm221, 1, 0
  %v234 = vsel %vm222, 1, 0
  %v235 = vsel %vm223, 1, 0
  %v236 = vsel %vm224, 1, 0
  %v237 = vcvt.s32.f32 %v225
  %v238 = vcvt.s32.f32 %v226
  %v239 = vcvt.s32.f32 %v227
  %v240 = vcvt.s32.f32 %v228
  %v241 = vcvt.s32.f32 %v229
  %v242 = vcvt.s32.f32 %v230
  %v243 = vcvt.s32.f32 %v231
  %v244 = vcvt.s32.f32 %v232
  %v245 = vcvt.s32.f32 %v233
  %v246 = vcvt.s32.f32 %v234
  %v247 = vcvt.s32.f32 %v235
  %v248 = vcvt.s32.f32 %v236
  %v249 = vld [vmem:[%s4] sm:$0xff]
  %v250 = vld [vmem:[%s4 + $0x8] sm:$0xff]
  %vm251 = vcmask 130048
  %v253 = vsel %vm251, %v237, 0
  %v256 = vsel %vm251, %v238, 0
  %v259 = vsel %vm251, %v239, 0
  %v262 = vsel %vm251, %v240, 0
  %v265 = vsel %vm251, %v241, 0
  %v268 = vsel %vm251, %v242, 0
  %v271 = vsel %vm251, %v243, 0
  %v274 = vsel %vm251, %v244, 0
  %v277 = vsel %vm251, %v245, 0
  %v280 = vsel %vm251, %v246, 0
  %v283 = vsel %vm251, %v247, 0
  %v286 = vsel %vm251, %v248, 0
  %288 = vmatprep.subr.mxu0 0.0
  %289 = vmatpush1.msra.mxu0 %v249
  %290 = vmatprep.subr.mxu0 0.0
  %291 = vmatpush1.msra.mxu0 %v250
  %292 = vmatprep.subr.mxu0 0.0
  %293 = vmatpush1.msra.mxu0 0.0
  %294 = vmatprep.subr.mxu0 0.0
  %295 = vmatpush1.msra.mxu0 0.0
  %296 = vmatprep.subr.mxu0 0.0
  %297 = vmatpush1.msra.mxu0 0.0
  %298 = vmatprep.subr.mxu0 0.0
  %299 = vmatpush1.msra.mxu0 0.0
  %300 = vmatprep.subr.mxu0 0.0
  %301 = vmatpush1.msra.mxu0 0.0
  %302 = vmatprep.subr.mxu0 0.0
  %303 = vmatpush1.msra.mxu0 0.0
  %304 = vmatprep.subr.mxu0 0.0
  %305 = vmatpush1.msra.mxu0 0.0
  %306 = vmatprep.subr.mxu0 0.0
  %307 = vmatpush1.msra.mxu0 0.0
  %308 = vmatprep.subr.mxu0 0.0
  %309 = vmatpush1.msra.mxu0 0.0
  %310 = vmatprep.subr.mxu0 0.0
  %311 = vmatpush1.msra.mxu0 0.0
  %312 = vmatprep.subr.mxu0 0.0
  %313 = vmatpush1.msra.mxu0 0.0
  %314 = vmatprep.subr.mxu0 0.0
  %315 = vmatpush1.msra.mxu0 0.0
  %316 = vmatprep.subr.mxu0 0.0
  %317 = vmatpush1.msra.mxu0 0.0
  %318 = vmatprep.subr.mxu0 0.0
  %319 = vmatpush1.msra.mxu0 0.0
  %320 = vmatprep.subr.mxu0 0.0
  %321 = vmatpush1.msra.mxu0 0.0
  %322 = vmatprep.subr.mxu0 0.0
  %323 = vmatpush1.msra.mxu0 0.0
  %324 = vmatprep.subr.mxu0 0.0
  %325 = vmatpush1.msra.mxu0 0.0
  %326 = vmatprep.subr.mxu0 0.0
  %327 = vmatpush1.msra.mxu0 0.0
  %328 = vmatprep.subr.mxu0 0.0
  %329 = vmatpush1.msra.mxu0 0.0
  %330 = vmatprep.subr.mxu0 0.0
  %331 = vmatpush1.msra.mxu0 0.0
  %332 = vmatprep.subr.mxu0 0.0
  %333 = vmatpush1.msra.mxu0 0.0
  %334 = vmatprep.subr.mxu0 0.0
  %335 = vmatpush1.msra.mxu0 0.0
  %336 = vmatprep.subr.mxu0 0.0
  %337 = vmatpush1.msra.mxu0 0.0
  %338 = vmatprep.subr.mxu0 0.0
  %339 = vmatpush1.msra.mxu0 0.0
  %340 = vmatprep.subr.mxu0 0.0
  %341 = vmatpush1.msra.mxu0 0.0
  %342 = vmatprep.subr.mxu0 0.0
  %343 = vmatpush1.msra.mxu0 0.0
  %344 = vmatprep.subr.mxu0 0.0
  %345 = vmatpush1.msra.mxu0 0.0
  %346 = vmatprep.subr.mxu0 0.0
  %347 = vmatpush1.msra.mxu0 0.0
  %348 = vmatprep.subr.mxu0 0.0
  %349 = vmatpush1.msra.mxu0 0.0
  %350 = vmatprep.subr.mxu0 0.0
  %351 = vmatpush1.msra.mxu0 0.0
  %352 = vmatprep.mubr.f32.mxu0 0.0
  %353 = vmatmul.mubr.f32.gmra.mrb[0].mxu0 %v253
  %v354 = vpop.f32.mrb[0].mxu0
  %v355 = vadd.f32 0.0, %v354
  %v356 = vpop.f32.mrb[0].mxu0
  %357 = vmatprep.mubr.f32.mxu0 0.0
  %358 = vmatmul.mubr.f32.gmra.mrb[0].mxu0 %v256
  %v359 = vpop.f32.mrb[0].mxu0
  %v360 = vadd.f32 0.0, %v359
  %v361 = vpop.f32.mrb[0].mxu0
  %362 = vmatprep.mubr.f32.mxu0 0.0
  %363 = vmatmul.mubr.f32.gmra.mrb[0].mxu0 %v259
  %v364 = vpop.f32.mrb[0].mxu0
  %v365 = vadd.f32 0.0, %v364
  %v366 = vpop.f32.mrb[0].mxu0
  %367 = vmatprep.mubr.f32.mxu0 0.0
  %368 = vmatmul.mubr.f32.gmra.mrb[0].mxu0 %v262
  %v369 = vpop.f32.mrb[0].mxu0
  %v370 = vadd.f32 0.0, %v369
  %v371 = vpop.f32.mrb[0].mxu0
  %372 = vmatprep.mubr.f32.mxu0 0.0
  %373 = vmatmul.mubr.f32.gmra.mrb[0].mxu0 %v265
  %v374 = vpop.f32.mrb[0].mxu0
  %v375 = vadd.f32 0.0, %v374
  %v376 = vpop.f32.mrb[0].mxu0
  %377 = vmatprep.mubr.f32.mxu0 0.0
  %378 = vmatmul.mubr.f32.gmra.mrb[0].mxu0 %v268
  %v379 = vpop.f32.mrb[0].mxu0
  %v380 = vadd.f32 0.0, %v379
  %v381 = vpop.f32.mrb[0].mxu0
  %382 = vmatprep.mubr.f32.mxu0 0.0
  %383 = vmatmul.mubr.f32.gmra.mrb[0].mxu0 %v271
  %v384 = vpop.f32.mrb[0].mxu0
  %v385 = vadd.f32 0.0, %v384
  %v386 = vpop.f32.mrb[0].mxu0
  %387 = vmatprep.mubr.f32.mxu0 0.0
  %388 = vmatmul.mubr.f32.gmra.mrb[0].mxu0 %v274
  %v389 = vpop.f32.mrb[0].mxu0
  %v390 = vadd.f32 0.0, %v389
  %v391 = vpop.f32.mrb[0].mxu0
  %392 = vmatprep.mubr.f32.mxu0 0.0
  %393 = vmatmul.mubr.f32.gmra.mrb[0].mxu0 %v277
  %v394 = vpop.f32.mrb[0].mxu0
  %v395 = vadd.f32 0.0, %v394
  %v396 = vpop.f32.mrb[0].mxu0
  %397 = vmatprep.mubr.f32.mxu0 0.0
  %398 = vmatmul.mubr.f32.gmra.mrb[0].mxu0 %v280
  %v399 = vpop.f32.mrb[0].mxu0
  %v400 = vadd.f32 0.0, %v399
  %v401 = vpop.f32.mrb[0].mxu0
  %402 = vmatprep.mubr.f32.mxu0 0.0
  %403 = vmatmul.mubr.f32.gmra.mrb[0].mxu0 %v283
  %v404 = vpop.f32.mrb[0].mxu0
  %v405 = vadd.f32 0.0, %v404
  %v406 = vpop.f32.mrb[0].mxu0
  %407 = vmatprep.mubr.f32.mxu0 0.0
  %408 = vmatmul.mubr.f32.gmra.mrb[0].mxu0 %v286
  %v409 = vpop.f32.mrb[0].mxu0
  %v410 = vadd.f32 0.0, %v409
  %v411 = vpop.f32.mrb[0].mxu0
  %412 = vdwg.mxu0
  %413 = vst.msk [vmem:[%s6] sm:$0xff] %vm156, %v355
  %414 = vst.msk [vmem:[%s6 + $0x8] sm:$0xff] %vm156, %v360
  %415 = vst.msk [vmem:[%s6 + $0x10] sm:$0xff] %vm156, %v365
  %416 = vst.msk [vmem:[%s6 + $0x18] sm:$0xff] %vm156, %v370
  %417 = vst.msk [vmem:[%s6 + $0x20] sm:$0xff] %vm156, %v375
  %418 = vst.msk [vmem:[%s6 + $0x28] sm:$0xff] %vm156, %v380
  %419 = vst.msk [vmem:[%s6 + $0x30] sm:$0xff] %vm156, %v385
  %420 = vst.msk [vmem:[%s6 + $0x38] sm:$0xff] %vm156, %v390
  %421 = vst.msk [vmem:[%s6 + $0x40] sm:$0xff] %vm156, %v395
  %422 = vst.msk [vmem:[%s6 + $0x48] sm:$0xff] %vm156, %v400
  %423 = vst.msk [vmem:[%s6 + $0x50] sm:$0xff] %vm156, %v405
  %424 = vst.msk [vmem:[%s6 + $0x58] sm:$0xff] %vm156, %v410
  // Predicated region
  $region22: #{tpu_custom_call.1} parent=0 // pred_check
    _
  $region23: #{tpu_custom_call.1} parent=0 // pred_check_branch
    %426 = sbr.rel (0) target = $region25
  $region24: #{tpu_custom_call.1} parent=0 // pred_region
    _
  $region25: #{tpu_custom_call.1} parent=0 // pred_fallthru
    _
  // Predicated region
  $region26: #{tpu_custom_call.1} parent=0 // pred_check
    _
  $region27: #{tpu_custom_call.1} parent=0 // pred_check_branch
    %428 = sbr.rel (0) target = $region29
  $region28: #{tpu_custom_call.1} parent=0 // pred_region
    _
  $region29: #{tpu_custom_call.1} parent=0 // pred_fallthru
    _
  // Predicated region
  $region30: #{tpu_custom_call.1} parent=0 // pred_check
    _
  $region31: #{tpu_custom_call.1} parent=0 // pred_check_branch
    %430 = sbr.rel (0) target = $region33
  $region32: #{tpu_custom_call.1} parent=0 // pred_region
    _
  $region33: #{tpu_custom_call.1} parent=0 // pred_fallthru
    _
  // Predicated region
  $region34: #{tpu_custom_call.1} parent=0 // pred_check
    _
  $region35: #{tpu_custom_call.1} parent=0 // pred_check_branch
    %432 = sbr.rel (0) target = $region37
  $region36: #{tpu_custom_call.1} parent=0 // pred_region
    _
  $region37: #{tpu_custom_call.1} parent=0 // pred_fallthru
    _

</llo_original>
